<compile_context>
chip_gen: v5e
topology: v5e:2x2
jax: 0.10.0
libtpu: 0.0.40
codegen_flags: <defaults>
</compile_context>

<pallas_src>
import functools

import jax
import jax.numpy as jnp
from jax import lax
from jax.experimental import pallas as pl
from jax.experimental.pallas import tpu as pltpu


def _round_up(a, b):
    return (a + b - 1) // b * b


def _adain_kernel(x_ref, g_ref, b_ref, o_ref, *, eps, hw, pad, inv_dof,
                  row_tile, resident_gb):
    """Normalize `row_tile` (n, c) instances.

    x_ref: (row_tile, HW_pad) input tile (spatial axis on lanes).
    g_ref, b_ref: per-instance affine params (float32).
        resident_gb=True  -> full (rows_pad, 1) arrays, resident in VMEM
        resident_gb=False -> per-step (row_tile, 1) blocks
    """
    if resident_gb:
        r0 = pl.multiple_of(pl.program_id(0) * row_tile, row_tile)
        gamma = g_ref[pl.ds(r0, row_tile), :]           # (R, 1)
        beta = b_ref[pl.ds(r0, row_tile), :]            # (R, 1)
    else:
        gamma = g_ref[...]
        beta = b_ref[...]

    x = x_ref[...].astype(jnp.float32)                  # (R, HW_pad)

    # Mean over the true spatial extent; zero padding does not change the sum.
    mean = jnp.sum(x, axis=1, keepdims=True) * (1.0 / hw)           # (R, 1)
    diff = x - mean
    ss = jnp.sum(diff * diff, axis=1, keepdims=True)                # (R, 1)
    if pad > 0:
        # Each zero-padded lane contributed exactly mean^2 -- remove it.
        ss = ss - pad * (mean * mean)
    var = ss * inv_dof                   # unbiased (ddof=1), matches torch.var
    inv_std = 1.0 / jnp.sqrt(var + eps)  # per-row scalars only -> cheap

    # Fold the per-row scalars before touching the full tile again.
    scale = inv_std * gamma                                          # (R, 1)
    shift = beta - mean * scale                                      # (R, 1)
    o_ref[...] = (x * scale + shift).astype(o_ref.dtype)


# Total VMEM budget for one grid step's working set (double-buffered in+out
# x tiles + f32 temporaries).  Conservative for v7x's 64 MiB physical VMEM.
_VMEM_TOTAL_BUDGET = 40 * 1024 * 1024


def adain(x, gamma, beta, eps=1e-5):
    """x: (N, C, H, W); gamma, beta: (N, C).  Returns (N, C, H, W)."""
    N, C, H, W = x.shape
    HW = H * W
    rows = N * C
    dtype_bytes = x.dtype.itemsize
    # Minimum sublane packing for the row (second-to-last) axis: 8 for 4-byte,
    # 16 for 2-byte (bf16), 32 for 1-byte dtypes.
    min_rows = max(8, 32 // dtype_bytes)

    # Lane-dense spatial axis.
    HW_pad = _round_up(HW, 128)
    pad = HW_pad - HW

    # --- row tile -----------------------------------------------------------
    # Per-row VMEM cost: 2 buffers x (in + out) tiles of x, ~3 f32-width
    # temporaries (x_f32 / diff / pre-cast result), plus tiny (R,1) columns.
    bytes_per_row = 4 * HW_pad * dtype_bytes + 3 * HW_pad * 4 + 4 * 512
    rows_ceil = _round_up(rows, min_rows)
    row_tile_max = max(min_rows,
                       (_VMEM_TOTAL_BUDGET // bytes_per_row) // min_rows * min_rows)
    row_tile_max = min(row_tile_max, rows_ceil)
    num_steps = pl.cdiv(rows_ceil, row_tile_max)
    # Balance the tile across grid steps so row padding waste stays < min_rows
    # per step (instead of padding rows up to a multiple of the max tile).
    row_tile = _round_up(pl.cdiv(rows_ceil, num_steps), min_rows)
    rows_pad = num_steps * row_tile
    grid = (num_steps,)
    # TODO(synk): for extremely large H*W (where even row_tile == min_rows
    # exceeds the VMEM budget) split H*W onto a second "arbitrary" grid axis
    # and accumulate sum / sum-of-squares in scratch; not needed for typical
    # adaIN feature-map sizes.

    # --- flatten / pad inputs ------------------------------------------------
    x2 = x.reshape(rows, HW)
    g2 = gamma.reshape(rows, 1).astype(jnp.float32)
    b2 = beta.reshape(rows, 1).astype(jnp.float32)
    if pad or rows_pad != rows:
        x2 = jnp.pad(x2, ((0, rows_pad - rows), (0, pad)))
        g2 = jnp.pad(g2, ((0, rows_pad - rows), (0, 0)))
        b2 = jnp.pad(b2, ((0, rows_pad - rows), (0, 0)))

    # gamma/beta: keep whole arrays resident in VMEM (constant index map ->
    # single DMA) unless N*C is so large their lane-padded footprint matters.
    gb_resident_bytes = 2 * 2 * rows_pad * 512          # 2 arrays x 2 buffers
    resident_gb = gb_resident_bytes <= (8 << 20)
    if resident_gb:
        g_spec = pl.BlockSpec((rows_pad, 1), lambda i: (0, 0))
        b_spec = pl.BlockSpec((rows_pad, 1), lambda i: (0, 0))
        gb_bytes = gb_resident_bytes
    else:
        g_spec = pl.BlockSpec((row_tile, 1), lambda i: (i, 0))
        b_spec = pl.BlockSpec((row_tile, 1), lambda i: (i, 0))
        gb_bytes = 2 * 2 * row_tile * 512

    # Explicit scoped-VMEM limit: working set + headroom, never above v7x's
    # 64 MiB physical VMEM.
    working = (4 * row_tile * HW_pad * dtype_bytes
               + 3 * row_tile * HW_pad * 4
               + gb_bytes)
    vmem_limit = min(64 << 20, max(32 << 20, working + (2 << 20)))

    inv_dof = (1.0 / (HW - 1.0)) if HW > 1 else float("nan")  # torch var on 1 elem -> nan
    kernel = functools.partial(
        _adain_kernel,
        eps=float(eps), hw=float(HW), pad=float(pad), inv_dof=inv_dof,
        row_tile=row_tile, resident_gb=resident_gb)

    cost = pl.CostEstimate(
        flops=6 * rows_pad * HW_pad,
        transcendentals=rows_pad,
        bytes_accessed=2 * rows_pad * HW_pad * dtype_bytes + 4 * rows * 4)

    out2 = pl.pallas_call(
        kernel,
        out_shape=jax.ShapeDtypeStruct((rows_pad, HW_pad), x.dtype),
        grid_spec=pltpu.PrefetchScalarGridSpec(
            num_scalar_prefetch=0,
            grid=grid,
            in_specs=[
                pl.BlockSpec((row_tile, HW_pad), lambda i: (i, 0)),
                g_spec,
                b_spec,
            ],
            out_specs=pl.BlockSpec((row_tile, HW_pad), lambda i: (i, 0)),
        ),
        compiler_params=pltpu.CompilerParams(
            dimension_semantics=("parallel",),
            vmem_limit_bytes=int(vmem_limit),
        ),
        cost_estimate=cost,
    )(x2, g2, b2)

    if pad or rows_pad != rows:
        out2 = out2[:rows, :HW]
    return out2.reshape(N, C, H, W)


def adain_ref(x, gamma, beta, eps=1e-5):
    """Pure-JAX reference matching the PyTorch module."""
    xf = x.astype(jnp.float32)
    mean = jnp.mean(xf, axis=(2, 3), keepdims=True)
    var = jnp.var(xf, axis=(2, 3), keepdims=True, ddof=1)  # unbiased, torch default
    out = (xf - mean) / jnp.sqrt(var + eps)
    out = out * gamma[:, :, None, None].astype(jnp.float32) \
        + beta[:, :, None, None].astype(jnp.float32)
    return out.astype(x.dtype)


if __name__ == "__main__":
    key = jax.random.PRNGKey(0)
    kx, kg, kb = jax.random.split(key, 3)

    # Main path: H*W is a multiple of 128, rows a multiple of 8.
    N, C, H, W = 2, 4, 16, 16
    x = jax.random.normal(kx, (N, C, H, W), dtype=jnp.float32)
    gamma = jax.random.normal(kg, (N, C), dtype=jnp.float32)
    beta = jax.random.normal(kb, (N, C), dtype=jnp.float32)

    out = jax.block_until_ready(adain(x, gamma, beta))
    ref = adain_ref(x, gamma, beta)
    assert out.shape == (N, C, H, W)
    assert jnp.allclose(out, ref, atol=1e-4, rtol=1e-4), "mismatch vs reference"

    # Padded / odd-shape path (H*W not a multiple of 128, rows not a multiple
    # of the row tile).
    N2, C2, H2, W2 = 2, 3, 7, 7
    x2 = jax.random.normal(kx, (N2, C2, H2, W2), dtype=jnp.float32)
    g2 = jax.random.normal(kg, (N2, C2), dtype=jnp.float32)
    b2 = jax.random.normal(kb, (N2, C2), dtype=jnp.float32)
    out2 = jax.block_until_ready(adain(x2, g2, b2))
    ref2 = adain_ref(x2, g2, b2)
    assert jnp.allclose(out2, ref2, atol=1e-4, rtol=1e-4), \
        "mismatch vs reference (padded path)"

    print("KERNEL_OK")
</pallas_src>

<mosaic_0001>
module attributes {stable_mosaic.version = 11 : i64} {
  func.func @_adain_kernel(%arg0: i32, %arg1: memref<8x256xf32, #tpu.memory_space<vmem>>, %arg2: memref<8x1xf32, #tpu.memory_space<vmem>>, %arg3: memref<8x1xf32, #tpu.memory_space<vmem>>, %arg4: memref<8x256xf32, #tpu.memory_space<vmem>>) attributes {dimension_semantics = [#tpu.dimension_semantics<parallel>], iteration_bounds = array<i64: 1>, scalar_prefetch = 0 : i64, scratch_operands = 0 : i64, tpu.core_type = #tpu.core_type<tc>, window_params = [{transform_indices = @transform_0, window_bounds = array<i64: 8, 256>}, {pipeline_mode = #tpu.pipeline_mode<synchronous>, transform_indices = @transform_1, window_bounds = array<i64: 8, 1>}, {pipeline_mode = #tpu.pipeline_mode<synchronous>, transform_indices = @transform_2, window_bounds = array<i64: 8, 1>}, {transform_indices = @transform_3, window_bounds = array<i64: 8, 256>}]} {
    %c8_i32 = arith.constant 8 : i32
    %0 = arith.muli %arg0, %c8_i32 : i32
    %1 = tpu.assume_multiple %0, 8 : i32
    %2 = arith.index_cast %1 : i32 to index
    %c0 = arith.constant 0 : index
    %3 = vector.load %arg2[%2, %c0] : memref<8x1xf32, #tpu.memory_space<vmem>>, vector<8x1xf32>
    %4 = arith.index_cast %1 : i32 to index
    %c0_0 = arith.constant 0 : index
    %5 = vector.load %arg3[%4, %c0_0] : memref<8x1xf32, #tpu.memory_space<vmem>>, vector<8x1xf32>
    %c0_1 = arith.constant 0 : index
    %c0_2 = arith.constant 0 : index
    %6 = vector.load %arg1[%c0_1, %c0_2] : memref<8x256xf32, #tpu.memory_space<vmem>>, vector<8x256xf32>
    %cst = arith.constant dense<0.000000e+00> : vector<8xf32>
    %7 = vector.multi_reduction <add>, %6, %cst [1] : vector<8x256xf32> to vector<8xf32>
    %8 = vector.shape_cast %7 : vector<8xf32> to vector<8x1xf32>
    %cst_3 = arith.constant 3.906250e-03 : f32
    %9 = vector.broadcast %cst_3 : f32 to vector<8x1xf32>
    %10 = arith.mulf %8, %9 : vector<8x1xf32>
    %11 = vector.broadcast %10 : vector<8x1xf32> to vector<8x256xf32>
    %12 = arith.subf %6, %11 : vector<8x256xf32>
    %13 = arith.mulf %12, %12 : vector<8x256xf32>
    %cst_4 = arith.constant dense<0.000000e+00> : vector<8xf32>
    %14 = vector.multi_reduction <add>, %13, %cst_4 [1] : vector<8x256xf32> to vector<8xf32>
    %15 = vector.shape_cast %14 : vector<8xf32> to vector<8x1xf32>
    %cst_5 = arith.constant 0.00392156886 : f32
    %16 = vector.broadcast %cst_5 : f32 to vector<8x1xf32>
    %17 = arith.mulf %15, %16 : vector<8x1xf32>
    %cst_6 = arith.constant 9.99999974E-6 : f32
    %18 = vector.broadcast %cst_6 : f32 to vector<8x1xf32>
    %19 = arith.addf %17, %18 : vector<8x1xf32>
    %20 = math.sqrt %19 : vector<8x1xf32>
    %cst_7 = arith.constant 1.000000e+00 : f32
    %21 = vector.broadcast %cst_7 : f32 to vector<8x1xf32>
    %22 = arith.divf %21, %20 : vector<8x1xf32>
    %23 = arith.mulf %22, %3 : vector<8x1xf32>
    %24 = arith.mulf %10, %23 : vector<8x1xf32>
    %25 = arith.subf %5, %24 : vector<8x1xf32>
    %26 = vector.broadcast %23 : vector<8x1xf32> to vector<8x256xf32>
    %27 = arith.mulf %6, %26 : vector<8x256xf32>
    %28 = vector.broadcast %25 : vector<8x1xf32> to vector<8x256xf32>
    %29 = arith.addf %27, %28 : vector<8x256xf32>
    %c0_8 = arith.constant 0 : index
    %c0_9 = arith.constant 0 : index
    %30 = vector.load %arg4[%c0_8, %c0_9] : memref<8x256xf32, #tpu.memory_space<vmem>>, vector<8x256xf32>
    tpu.vector_store %arg4[%c0_8, %c0_9], %29 {strides = array<i32>} : memref<8x256xf32, #tpu.memory_space<vmem>>, vector<8x256xf32>,
    return
  }
  func.func @transform_0(%arg0: i32) -> (i32, i32) {
    %c0_i32 = arith.constant 0 : i32
    %c0_i32_0 = arith.constant 0 : i32
    return %arg0, %c0_i32 : i32, i32
  }
  func.func @transform_1(%arg0: i32) -> (i32, i32) {
    %c0_i32 = arith.constant 0 : i32
    %c0_i32_0 = arith.constant 0 : i32
    %c0_i32_1 = arith.constant 0 : i32
    return %c0_i32, %c0_i32_0 : i32, i32
  }
  func.func @transform_2(%arg0: i32) -> (i32, i32) {
    %c0_i32 = arith.constant 0 : i32
    %c0_i32_0 = arith.constant 0 : i32
    %c0_i32_1 = arith.constant 0 : i32
    return %c0_i32, %c0_i32_0 : i32, i32
  }
  func.func @transform_3(%arg0: i32) -> (i32, i32) {
    %c0_i32 = arith.constant 0 : i32
    %c0_i32_0 = arith.constant 0 : i32
    return %arg0, %c0_i32 : i32, i32
  }
}

</mosaic_0001>

<llo_original>
// kernel: tpu_custom_call.1
$region0: #{tpu_custom_call.1}
  #allocation0 [shape = 'u32[]', space=smem, size = 0x4, offset = 0x4, fixed_abs, tag = 'smem constant byte address 0x4 - core index']
  #allocation1 [shape = 'u32[72,128]{1,0:T(1,128)}', space=vmem, size = 0x9000, scoped, tag = 'internal scratch']
  %s0 = inlined_call_operand.vmem [shape: f32[8,256], index: 0, kind: input, shape index: {}]
  %s1 = inlined_call_operand.vmem [shape: f32[8,1], index: 1, kind: input, shape index: {}]
  %s2 = inlined_call_operand.vmem [shape: f32[8,1], index: 2, kind: input, shape index: {}]
  %s3 = inlined_call_operand.hbm [shape: f32[8,256], index: 3, kind: output, shape index: {}]
  %s4 = sld [smem:[#allocation0]]
  $region22: #{tpu_custom_call.1} parent=0
    _
  %s6 = ssub.s32 1, %s4
  %s7 = scalar_select 0, %s6, %s4
  $region1: #{tpu_custom_call.1} parent=0
    #allocation2 [shape = 'u8[8192]{0}', space=vmem, size = 0x2000, scoped, tag = 'output window, operand 0, single buffered']
    #allocation3 [shape = 's32[1]{0}', space=sflag, size = 0x4, scoped, tag = 'scoped memory for tpu_custom_call.1']
    %8 = vsyncpa [#allocation3], 0
    // Predicated region
    $region2: #{tpu_custom_call.1} parent=1 // pred_check
      _
    $region3: #{tpu_custom_call.1} parent=1 // pred_check_branch
      %10 = sbr.rel (0) target = $region5
    $region4: #{tpu_custom_call.1} parent=1 // pred_region
      _
    $region5: #{tpu_custom_call.1} parent=1 // pred_fallthru
      _
    // Predicated region
    $region6: #{tpu_custom_call.1} parent=1 // pred_check
      _
    $region7: #{tpu_custom_call.1} parent=1 // pred_check_branch
      %12 = sbr.rel (0) target = $region9
    $region8: #{tpu_custom_call.1} parent=1 // pred_region
      _
    $region9: #{tpu_custom_call.1} parent=1 // pred_fallthru
      _
    // Predicated region
    $region10: #{tpu_custom_call.1} parent=1 // pred_check
      _
    $region11: #{tpu_custom_call.1} parent=1 // pred_check_branch
      %14 = sbr.rel (0) target = $region13
    $region12: #{tpu_custom_call.1} parent=1 // pred_region
      _
    $region13: #{tpu_custom_call.1} parent=1 // pred_fallthru
      _
    %s15 = smul.u32 0, 8
    %s16 = scalar_lea.vmem %s1, %s15
    %v17 = vld [vmem:[%s16] sm:$0xff]
    %s18 = scalar_lea.vmem %s2, %s15
    %v19 = vld [vmem:[%s18] sm:$0xff]
    %v20 = vld [vmem:[%s0] sm:$0xff]
    %v21 = vld [vmem:[%s0 + $0x8] sm:$0xff]
    %v22 = vadd.f32 %v20, %v21
    %23 = vadd.xlane.f32.xlu0 %v22
    %v24 = vpop.xlane.xlu0 %23
    %v25 = vmul.f32 %v24, 0.00390625
    %v26 = vsub.f32 %v20, %v25
    %v27 = vsub.f32 %v21, %v25
    %v28 = vmul.f32 %v26, %v26
    %v29 = vmul.f32 %v27, %v27
    %v30 = vadd.f32 %v28, %v29
    %31 = vadd.xlane.f32.xlu0 %v30
    %v32 = vpop.xlane.xlu0 %31
    %v33 = vmul.f32 %v32, 0.003921569
    %v34 = vadd.f32 %v33, 1e-05
    %v35 = vrsqrt.pop %v34
    %v36 = vmul.f32 %v35, %v34
    %v37 = vmul.f32 %v36, %v35
    %v38 = vmul.f32 0.5, %v37
    %v39 = vsub.f32 1.5, %v38
    %v40 = vmul.f32 %v35, %v39
    %v41 = vmul.f32 %v34, %v40
    %vm42 = vcmp.eq.f32.partialorder %v34, inf
    %v43 = vsel %vm42, %v34, %v41
    %vm44 = vcmp.eq.f32.partialorder %v34, 0.0
    %v45 = vand.u32 %v34, 2147483648
    %v46 = vsel %vm44, %v45, %v43
    %v47 = vrcp.pop %v46
    %v48 = vmul.f32 %v46, %v47
    %v49 = vsub.f32 1.0, %v48
    %v50 = vmul.f32 %v47, %v49
    %v51 = vadd.f32 %v47, %v50
    %vm52 = vweird.f32 %v46
    %vm53 = vweird.f32 %v47
    %vm54 = vmor %vm52, %vm53
    %v55 = vsel %vm54, %v47, %v51
    %v56 = vand.u32 2147483647, %v46
    %vm57 = vcmp.eq.f32.partialorder %v56, 8.507059e+37
    %v58 = vand.u32 %v46, 2147483648
    %v59 = vor.u32 1.1754944e-38, %v58
    %v60 = vsel %vm57, %v59, %v55
    %v61 = vmul.f32 1.0, %v60
    %v62 = vmul.f32 %v61, %v17
    %v63 = vmul.f32 %v25, %v62
    %v64 = vsub.f32 %v19, %v63
    %66 = vset.pattern.permute.xlu0 0
    %67 = vperm.xlu0 %66, %v62
    %v68 = vpop.permute.xlu0 %67
    %v70 = vmul.f32 %v20, %v68
    %v71 = vmul.f32 %v21, %v68
    %73 = vset.pattern.permute.xlu0 0
    %74 = vperm.xlu0 %73, %v64
    %v75 = vpop.permute.xlu0 %74
    %v77 = vadd.f32 %v70, %v75
    %v78 = vadd.f32 %v71, %v75
    %79 = vst [vmem:[#allocation2] sm:$0xff] %v77
    %80 = vst [vmem:[#allocation2 + $0x8] sm:$0xff] %v78
    // Predicated region
    $region14: #{tpu_custom_call.1} parent=1 // pred_check
      _
    $region15: #{tpu_custom_call.1} parent=1 // pred_check_branch
      %82 = sbr.rel (0) target = $region17
    $region16: #{tpu_custom_call.1} parent=1 // pred_region
      %84 = vsyncadd [#allocation3], 0
      %s86 = sshll.u32 [#allocation2], 4
      %s87 = int_to_ptr.vmem [resolvable:$true] %s86
      %s88 = sshll.u32 %s3, 4
      %s89 = int_to_ptr.hbm [resolvable:$true] %s88
      %91 = dma.vmem_to_hbm [thread:$0]  %s87, 256, %s89, [#allocation3]
    $region17: #{tpu_custom_call.1} parent=1 // pred_fallthru
      _
    // Predicated region
    $region18: #{tpu_custom_call.1} parent=1 // pred_check
      _
    $region19: #{tpu_custom_call.1} parent=1 // pred_check_branch
      %93 = sbr.rel (0) target = $region21
    $region20: #{tpu_custom_call.1} parent=1 // pred_region
      %95 = dma.done [#allocation3], 256
    $region21: #{tpu_custom_call.1} parent=1 // pred_fallthru
      _
    %96 = vsyncpa [#allocation3], 1

</llo_original>
